<compile_context>
chip_gen: v7x
topology: tpu7x:2x2x1
jax: 0.10.0
libtpu: 0.0.40
codegen_flags: <defaults>
</compile_context>

<pallas_src>
import jax
import jax.numpy as jnp
from jax.experimental import pallas as pl
from jax.experimental.pallas import tpu as pltpu

# env.state_size is environment-dependent; use a small deterministic surrogate.
STATE_SIZE = 16          # TODO(synk): env.state_size comes from the external env
H1 = 128                 # fc_s / fc_a width
H2 = 64                  # fc_q width (real)
HQP = 128                # fc_q width padded to a full lane tile
KIN = STATE_SIZE + 1     # packed [x | a] contraction dim
BIAS_LANES = 512         # packed bias row: [bs|ba (256) | bq_pad (128) | bo | 0...]
OUT_LANES = 128          # lane-dense output block; real q lives in column 0


def qnet_kernel(xa_ref, w_sa_ref, w_qo_ref, b_ref, out_ref):
    xa = xa_ref[...]                                     # (BT, KIN)

    b_sa = b_ref[:, 0:2 * H1]                            # (1, 256)
    b_q = b_ref[:, 2 * H1:2 * H1 + HQP]                  # (1, 128), lanes 64.. = 0
    b_o = b_ref[:, 2 * H1 + HQP:2 * H1 + HQP + 1]        # (1, 1)

    # fc_s and fc_a fused into one MXU pass (block-diagonal weight).
    h = jnp.tanh(
        jnp.dot(xa, w_sa_ref[...], preferred_element_type=jnp.float32) + b_sa
    )                                                    # (BT, 256) == concat([h1, h2])

    # fc_q, output lanes padded 64 -> 128 with zero weights/bias.
    q = jnp.tanh(
        jnp.dot(h, w_qo_ref[0:2 * H1, :], preferred_element_type=jnp.float32) + b_q
    )                                                    # (BT, 128)

    # fc_out as VPU multiply + lane reduction (XLU) instead of an N=1 MXU matmul.
    wo_row = w_qo_ref[2 * H1:2 * H1 + 1, :]              # (1, 128), lanes 64.. = 0
    out = jnp.sum(q * wo_row, axis=-1, keepdims=True) + b_o  # (BT, 1)

    # Lane-dense store; wrapper slices column 0.
    out_ref[...] = jnp.broadcast_to(out, out_ref.shape)  # (BT, 128)


def init_params(key):
    """nn.Linear-style init U(-1/sqrt(fan_in), 1/sqrt(fan_in)); weights stored (in, out)."""
    def linear(k, fan_in, fan_out):
        kw, kb = jax.random.split(k)
        bound = 1.0 / jnp.sqrt(jnp.float32(fan_in))
        w = jax.random.uniform(kw, (fan_in, fan_out), jnp.float32, -bound, bound)
        b = jax.random.uniform(kb, (1, fan_out), jnp.float32, -bound, bound)
        return w, b

    k1, k2, k3, k4 = jax.random.split(key, 4)
    ws, bs = linear(k1, STATE_SIZE, H1)   # fc_s
    wa, ba = linear(k2, 1, H1)            # fc_a
    wq, bq = linear(k3, 2 * H1, H2)       # fc_q
    wo, bo = linear(k4, H2, 1)            # fc_out
    return dict(ws=ws, bs=bs, wa=wa, ba=ba, wq=wq, bq=bq, wo=wo, bo=bo)


def pack_params(p):
    """One-time packing of the 8 PyTorch tensors into 3 lane-aligned slabs."""
    # block_diag(Ws, Wa): (KIN, 256)
    w_sa = jnp.zeros((KIN, 2 * H1), jnp.float32)
    w_sa = w_sa.at[:STATE_SIZE, :H1].set(p["ws"])
    w_sa = w_sa.at[STATE_SIZE:, H1:].set(p["wa"])

    # [Wq padded to 128 out-lanes ; Wo^T padded to 128 lanes]  ->  (257, 128)
    w_q_pad = jnp.zeros((2 * H1, HQP), jnp.float32).at[:, :H2].set(p["wq"])
    w_o_row = jnp.zeros((1, HQP), jnp.float32).at[:, :H2].set(p["wo"].T)
    w_qo = jnp.concatenate([w_q_pad, w_o_row], axis=0)

    # Packed bias row (1, 512): [bs | ba | bq (zero-padded to 128) | bo | zeros]
    b_all = jnp.zeros((1, BIAS_LANES), jnp.float32)
    b_all = b_all.at[:, :H1].set(p["bs"])
    b_all = b_all.at[:, H1:2 * H1].set(p["ba"])
    b_all = b_all.at[:, 2 * H1:2 * H1 + H2].set(p["bq"])
    b_all = b_all.at[:, 2 * H1 + HQP:2 * H1 + HQP + 1].set(p["bo"])
    return dict(w_sa=w_sa, w_qo=w_qo, b_all=b_all)


def qnet_forward(x, a, packed):
    B = x.shape[0]
    xa = jnp.concatenate([x, a], axis=1)                 # (B, KIN)

    # Batch tile: one program for small batches; megacore-parallel grid for big ones.
    bt = 256 if B > 256 else max(8, ((B + 7) // 8) * 8)
    bp = ((B + bt - 1) // bt) * bt
    if bp != B:
        xa = jnp.pad(xa, ((0, bp - B), (0, 0)))
    grid = (bp // bt,)

    out = pl.pallas_call(
        qnet_kernel,
        out_shape=jax.ShapeDtypeStruct((bp, OUT_LANES), jnp.float32),
        grid=grid,
        in_specs=[
            pl.BlockSpec((bt, KIN), lambda i: (i, 0)),
            pl.BlockSpec((KIN, 2 * H1), lambda i: (0, 0)),
            pl.BlockSpec((2 * H1 + 1, HQP), lambda i: (0, 0)),
            pl.BlockSpec((1, BIAS_LANES), lambda i: (0, 0)),
        ],
        out_specs=pl.BlockSpec((bt, OUT_LANES), lambda i: (i, 0)),
        compiler_params=pltpu.CompilerParams(
            dimension_semantics=("parallel",)),
    )(xa, packed["w_sa"], packed["w_qo"], packed["b_all"])

    return out[:B, :1]


def qnet_forward_ref(x, a, p):
    """Pure-JAX reference of the PyTorch forward (unpacked params)."""
    h1 = jnp.tanh(x @ p["ws"] + p["bs"])
    h2 = jnp.tanh(a @ p["wa"] + p["ba"])
    cat = jnp.concatenate([h1, h2], axis=1)
    q = jnp.tanh(cat @ p["wq"] + p["bq"])
    return q @ p["wo"] + p["bo"]


if __name__ == "__main__":
    key = jax.random.PRNGKey(0)
    kp, kx, ka = jax.random.split(key, 3)

    B = 8
    params = init_params(kp)
    packed = pack_params(params)
    x = jax.random.normal(kx, (B, STATE_SIZE), jnp.float32)   # state batch
    a = jax.random.normal(ka, (B, 1), jnp.float32)            # action batch

    out = jax.block_until_ready(qnet_forward(x, a, packed))
    ref = qnet_forward_ref(x, a, params)

    assert out.shape == (B, 1)
    assert jnp.allclose(out, ref, atol=1e-5, rtol=1e-5), "mismatch vs reference"

    print("KERNEL_OK")
</pallas_src>

<mosaic_0001>
module attributes {stable_mosaic.version = 11 : i64} {
  func.func @qnet_kernel(%arg0: i32, %arg1: memref<8x17xf32, #tpu.memory_space<vmem>>, %arg2: memref<17x256xf32, #tpu.memory_space<vmem>>, %arg3: memref<257x128xf32, #tpu.memory_space<vmem>>, %arg4: memref<1x512xf32, #tpu.memory_space<vmem>>, %arg5: memref<8x128xf32, #tpu.memory_space<vmem>>) attributes {dimension_semantics = [#tpu.dimension_semantics<parallel>], iteration_bounds = array<i64: 1>, scalar_prefetch = 0 : i64, scratch_operands = 0 : i64, tpu.core_type = #tpu.core_type<tc>, window_params = [{transform_indices = @transform_0, window_bounds = array<i64: 8, 17>}, {pipeline_mode = #tpu.pipeline_mode<synchronous>, transform_indices = @transform_1, window_bounds = array<i64: 17, 256>}, {pipeline_mode = #tpu.pipeline_mode<synchronous>, transform_indices = @transform_2, window_bounds = array<i64: 257, 128>}, {pipeline_mode = #tpu.pipeline_mode<synchronous>, transform_indices = @transform_3, window_bounds = array<i64: 1, 512>}, {transform_indices = @transform_4, window_bounds = array<i64: 8, 128>}]} {
    %c0 = arith.constant 0 : index
    %c0_0 = arith.constant 0 : index
    %0 = vector.load %arg1[%c0, %c0_0] : memref<8x17xf32, #tpu.memory_space<vmem>>, vector<8x17xf32>
    %c0_1 = arith.constant 0 : index
    %c0_2 = arith.constant 0 : index
    %1 = vector.load %arg4[%c0_1, %c0_2] : memref<1x512xf32, #tpu.memory_space<vmem>>, vector<1x256xf32>
    %c0_3 = arith.constant 0 : index
    %c256 = arith.constant 256 : index
    %2 = vector.load %arg4[%c0_3, %c256] : memref<1x512xf32, #tpu.memory_space<vmem>>, vector<1x128xf32>
    %c0_4 = arith.constant 0 : index
    %c384 = arith.constant 384 : index
    %3 = vector.load %arg4[%c0_4, %c384] : memref<1x512xf32, #tpu.memory_space<vmem>>, vector<1x1xf32>
    %c0_5 = arith.constant 0 : index
    %c0_6 = arith.constant 0 : index
    %4 = vector.load %arg2[%c0_5, %c0_6] : memref<17x256xf32, #tpu.memory_space<vmem>>, vector<17x256xf32>
    %cst = arith.constant dense<0.000000e+00> : vector<8x256xf32>
    %5 = tpu.matmul %0, %4, %cst {dimension_numbers = #tpu.dot_dimension_numbers<[1], [0], [0], [1], [0, 0, 1, 1], [], []>} : vector<8x17xf32>, vector<17x256xf32>, vector<8x256xf32> -> vector<8x256xf32>
    %6 = vector.broadcast %1 : vector<1x256xf32> to vector<8x256xf32>
    %7 = arith.addf %5, %6 : vector<8x256xf32>
    %8 = math.tanh %7 : vector<8x256xf32>
    %c0_7 = arith.constant 0 : index
    %c0_8 = arith.constant 0 : index
    %9 = vector.load %arg3[%c0_7, %c0_8] : memref<257x128xf32, #tpu.memory_space<vmem>>, vector<256x128xf32>
    %cst_9 = arith.constant dense<0.000000e+00> : vector<8x128xf32>
    %10 = tpu.matmul %8, %9, %cst_9 {dimension_numbers = #tpu.dot_dimension_numbers<[1], [0], [0], [1], [0, 0, 1, 1], [], []>} : vector<8x256xf32>, vector<256x128xf32>, vector<8x128xf32> -> vector<8x128xf32>
    %11 = vector.broadcast %2 : vector<1x128xf32> to vector<8x128xf32>
    %12 = arith.addf %10, %11 : vector<8x128xf32>
    %13 = math.tanh %12 : vector<8x128xf32>
    %c256_10 = arith.constant 256 : index
    %c0_11 = arith.constant 0 : index
    %14 = vector.load %arg3[%c256_10, %c0_11] : memref<257x128xf32, #tpu.memory_space<vmem>>, vector<1x128xf32>
    %15 = vector.broadcast %14 : vector<1x128xf32> to vector<8x128xf32>
    %16 = arith.mulf %13, %15 : vector<8x128xf32>
    %cst_12 = arith.constant dense<0.000000e+00> : vector<8xf32>
    %17 = vector.multi_reduction <add>, %16, %cst_12 [1] : vector<8x128xf32> to vector<8xf32>
    %18 = vector.shape_cast %17 : vector<8xf32> to vector<8x1xf32>
    %19 = vector.broadcast %3 : vector<1x1xf32> to vector<8x1xf32>
    %20 = arith.addf %18, %19 : vector<8x1xf32>
    %21 = vector.shape_cast %20 : vector<8x1xf32> to vector<8x1xf32>
    %22 = vector.broadcast %21 : vector<8x1xf32> to vector<8x128xf32>
    %c0_13 = arith.constant 0 : index
    %c0_14 = arith.constant 0 : index
    %23 = vector.load %arg5[%c0_13, %c0_14] : memref<8x128xf32, #tpu.memory_space<vmem>>, vector<8x128xf32>
    tpu.vector_store %arg5[%c0_13, %c0_14], %22 {strides = array<i32>} : memref<8x128xf32, #tpu.memory_space<vmem>>, vector<8x128xf32>,
    return
  }
  func.func @transform_0(%arg0: i32) -> (i32, i32) {
    %c0_i32 = arith.constant 0 : i32
    %c0_i32_0 = arith.constant 0 : i32
    return %arg0, %c0_i32 : i32, i32
  }
  func.func @transform_1(%arg0: i32) -> (i32, i32) {
    %c0_i32 = arith.constant 0 : i32
    %c0_i32_0 = arith.constant 0 : i32
    %c0_i32_1 = arith.constant 0 : i32
    return %c0_i32, %c0_i32_0 : i32, i32
  }
  func.func @transform_2(%arg0: i32) -> (i32, i32) {
    %c0_i32 = arith.constant 0 : i32
    %c0_i32_0 = arith.constant 0 : i32
    %c0_i32_1 = arith.constant 0 : i32
    return %c0_i32, %c0_i32_0 : i32, i32
  }
  func.func @transform_3(%arg0: i32) -> (i32, i32) {
    %c0_i32 = arith.constant 0 : i32
    %c0_i32_0 = arith.constant 0 : i32
    %c0_i32_1 = arith.constant 0 : i32
    return %c0_i32, %c0_i32_0 : i32, i32
  }
  func.func @transform_4(%arg0: i32) -> (i32, i32) {
    %c0_i32 = arith.constant 0 : i32
    %c0_i32_0 = arith.constant 0 : i32
    return %arg0, %c0_i32 : i32, i32
  }
}

</mosaic_0001>

<llo_original>
// kernel: tpu_custom_call.1
$region0: #{tpu_custom_call.1}
  #allocation0 [shape = 'u32[]', space=smem, size = 0x4, offset = 0x4, fixed_abs, tag = 'smem constant byte address 0x4 - core index']
  #allocation1 [shape = 'u32[144,128]{1,0:T(1,128)}', space=vmem, size = 0x12000, scoped, tag = 'internal scratch']
  %s0 = inlined_call_operand.hbm [shape: f32[8,17], index: 0, kind: input, shape index: {}]
  %s1 = inlined_call_operand.hbm [shape: f32[17,256], index: 1, kind: input, shape index: {}]
  %s2 = inlined_call_operand.hbm [shape: f32[257,128], index: 2, kind: input, shape index: {}]
  %s3 = inlined_call_operand.vmem [shape: f32[1,512], index: 3, kind: input, shape index: {}]
  %s4 = inlined_call_operand.hbm [shape: f32[8,128], index: 4, kind: output, shape index: {}]
  %s5 = sld [smem:[#allocation0]]
  $region38: #{tpu_custom_call.1} parent=0
    _
  %s7 = ssub.s32 1, %s5
  %s8 = scalar_select 0, %s7, %s5
  $region1: #{tpu_custom_call.1} parent=0
    #allocation2 [shape = 'u8[4096]{0}', space=vmem, size = 0x1000, scoped, tag = 'input window, operand 0, single buffered']
    #allocation3 [shape = 's32[1]{0}', space=sflag, size = 0x4, scoped, tag = 'scoped memory for tpu_custom_call.1']
    #allocation4 [shape = 's32[1]{0}', space=sflag, size = 0x4, scoped, tag = 'scoped memory for tpu_custom_call.1']
    #allocation5 [shape = 'u8[24576]{0}', space=vmem, size = 0x6000, scoped, tag = 'input window, operand 1, single buffered']
    #allocation6 [shape = 's32[1]{0}', space=sflag, size = 0x4, scoped, tag = 'scoped memory for tpu_custom_call.1']
    #allocation7 [shape = 'u8[135168]{0}', space=vmem, size = 0x21000, scoped, tag = 'input window, operand 2, single buffered']
    #allocation8 [shape = 'u8[4096]{0}', space=vmem, size = 0x1000, scoped, tag = 'output window, operand 0, single buffered']
    %9 = vsyncpa [#allocation3], 0
    %10 = vsyncpa [#allocation6], 0
    %11 = vsyncpa [#allocation4], 0
    // Predicated region
    $region2: #{tpu_custom_call.1} parent=1 // pred_check
      _
    $region3: #{tpu_custom_call.1} parent=1 // pred_check_branch
      %13 = sbr.rel (0) target = $region5
    $region4: #{tpu_custom_call.1} parent=1 // pred_region
      %s15 = ssub.s32 128, 128
      %16 = vsyncadd [#allocation3], %s15
      %s18 = sshll.u32 [#allocation2], 4
      %s19 = int_to_ptr.vmem [resolvable:$true] %s18
      %21 = dma.hbm_to_vmem [thread:$0]  %s0, 128, %s19, [#allocation3]
    $region5: #{tpu_custom_call.1} parent=1 // pred_fallthru
      _
    // Predicated region
    $region6: #{tpu_custom_call.1} parent=1 // pred_check
      _
    $region7: #{tpu_custom_call.1} parent=1 // pred_check_branch
      %23 = sbr.rel (0) target = $region9
    $region8: #{tpu_custom_call.1} parent=1 // pred_region
      %s25 = ssub.s32 768, 768
      %26 = vsyncadd [#allocation6], %s25
      %s27 = sshll.u32 [#allocation5], 4
      %s28 = int_to_ptr.vmem [resolvable:$true] %s27
      %33 = dma.hbm_to_vmem [thread:$0]  %s1, 768, %s28, [#allocation6], 256, 256, 16
    $region9: #{tpu_custom_call.1} parent=1 // pred_fallthru
      _
    // Predicated region
    $region10: #{tpu_custom_call.1} parent=1 // pred_check
      _
    $region11: #{tpu_custom_call.1} parent=1 // pred_check_branch
      %35 = sbr.rel (0) target = $region13
    $region12: #{tpu_custom_call.1} parent=1 // pred_region
      %s37 = ssub.s32 4224, 4224
      %38 = vsyncadd [#allocation6], %s37
      %s39 = sshll.u32 [#allocation7], 4
      %s40 = int_to_ptr.vmem [resolvable:$true] %s39
      %45 = dma.hbm_to_vmem [thread:$0]  %s2, 4224, %s40, [#allocation6], 128, 128, 8
    $region13: #{tpu_custom_call.1} parent=1 // pred_fallthru
      _
    // Predicated region
    $region14: #{tpu_custom_call.1} parent=1 // pred_check
      _
    $region15: #{tpu_custom_call.1} parent=1 // pred_check_branch
      %47 = sbr.rel (0) target = $region17
    $region16: #{tpu_custom_call.1} parent=1 // pred_region
      _
    $region17: #{tpu_custom_call.1} parent=1 // pred_fallthru
      _
    // Predicated region
    $region18: #{tpu_custom_call.1} parent=1 // pred_check
      _
    $region19: #{tpu_custom_call.1} parent=1 // pred_check_branch
      %49 = sbr.rel (0) target = $region21
    $region20: #{tpu_custom_call.1} parent=1 // pred_region
      %50 = dma.done [#allocation3], 128
    $region21: #{tpu_custom_call.1} parent=1 // pred_fallthru
      _
    // Predicated region
    $region22: #{tpu_custom_call.1} parent=1 // pred_check
      _
    $region23: #{tpu_custom_call.1} parent=1 // pred_check_branch
      %52 = sbr.rel (0) target = $region25
    $region24: #{tpu_custom_call.1} parent=1 // pred_region
      %53 = dma.done [#allocation6], 768
    $region25: #{tpu_custom_call.1} parent=1 // pred_fallthru
      _
    // Predicated region
    $region26: #{tpu_custom_call.1} parent=1 // pred_check
      _
    $region27: #{tpu_custom_call.1} parent=1 // pred_check_branch
      %55 = sbr.rel (0) target = $region29
    $region28: #{tpu_custom_call.1} parent=1 // pred_region
      %56 = dma.done [#allocation6], 4224
    $region29: #{tpu_custom_call.1} parent=1 // pred_fallthru
      _
    %v57 = vld [vmem:[#allocation2] sm:$0xff]
    %v58 = vld [vmem:[%s3] sm:$0x3]
    %v59 = vld [vmem:[%s3 + $0x2] sm:$0x1]
    %v60 = vld [vmem:[%s3 + $0x3] sm:$0x1]
    %v61 = vld [vmem:[#allocation5] sm:$0xff]
    %v62 = vld [vmem:[#allocation5 + $0x8] sm:$0xff]
    %v63 = vld [vmem:[#allocation5 + $0x10] sm:$0xff]
    %v64 = vld [vmem:[#allocation5 + $0x18] sm:$0xff]
    %v65 = vld [vmem:[#allocation5 + $0x20] sm:$0x1]
    %v66 = vld [vmem:[#allocation5 + $0x28] sm:$0x1]
    %v68 = vlaneseq
    %v69 = vshrl.u32 %v68, 7
    %v70 = vsub.s32 0, %v69
    %v71 = vrot.slane %v58, %v70
    %v72 = vlaneseq
    %v73 = vshrl.u32 %v72, 7
    %v74 = vsub.s32 1, %v73
    %v75 = vrot.slane %v58, %v74
    %vm78 = vcmask 138240
    %v80 = vsel %vm78, %v57, 0
    %vm82 = vcmask 1040384
    %v84 = vsel %vm82, %v65, 0
    %v87 = vsel %vm82, %v66, 0
    %89 = vmatprep.subr.mxu0 %v62
    %90 = vmatpush1.msra.mxu0 %v61
    %91 = vmatprep.subr.mxu0 %v64
    %92 = vmatpush1.msra.mxu0 %v63
    %93 = vmatprep.subr.mxu0 %v87
    %94 = vmatpush1.msra.mxu0 %v84
    %95 = vmatprep.subr.mxu0 0.0
    %96 = vmatpush1.msra.mxu0 0.0
    %97 = vmatprep.subr.mxu0 0.0
    %98 = vmatpush1.msra.mxu0 0.0
    %99 = vmatprep.subr.mxu0 0.0
    %100 = vmatpush1.msra.mxu0 0.0
    %101 = vmatprep.subr.mxu0 0.0
    %102 = vmatpush1.msra.mxu0 0.0
    %103 = vmatprep.subr.mxu0 0.0
    %104 = vmatpush1.msra.mxu0 0.0
    %105 = vmatprep.subr.mxu0 0.0
    %106 = vmatpush1.msra.mxu0 0.0
    %107 = vmatprep.subr.mxu0 0.0
    %108 = vmatpush1.msra.mxu0 0.0
    %109 = vmatprep.subr.mxu0 0.0
    %110 = vmatpush1.msra.mxu0 0.0
    %111 = vmatprep.subr.mxu0 0.0
    %112 = vmatpush1.msra.mxu0 0.0
    %113 = vmatprep.subr.mxu0 0.0
    %114 = vmatpush1.msra.mxu0 0.0
    %115 = vmatprep.subr.mxu0 0.0
    %116 = vmatpush1.msra.mxu0 0.0
    %117 = vmatprep.subr.mxu0 0.0
    %118 = vmatpush1.msra.mxu0 0.0
    %119 = vmatprep.subr.mxu0 0.0
    %120 = vmatpush1.msra.mxu0 0.0
    %121 = vmatprep.subr.mxu0 0.0
    %122 = vmatpush1.msra.mxu0 0.0
    %123 = vmatprep.subr.mxu0 0.0
    %124 = vmatpush1.msra.mxu0 0.0
    %125 = vmatprep.subr.mxu0 0.0
    %126 = vmatpush1.msra.mxu0 0.0
    %127 = vmatprep.subr.mxu0 0.0
    %128 = vmatpush1.msra.mxu0 0.0
    %129 = vmatprep.subr.mxu0 0.0
    %130 = vmatpush1.msra.mxu0 0.0
    %131 = vmatprep.subr.mxu0 0.0
    %132 = vmatpush1.msra.mxu0 0.0
    %133 = vmatprep.subr.mxu0 0.0
    %134 = vmatpush1.msra.mxu0 0.0
    %135 = vmatprep.subr.mxu0 0.0
    %136 = vmatpush1.msra.mxu0 0.0
    %137 = vmatprep.subr.mxu0 0.0
    %138 = vmatpush1.msra.mxu0 0.0
    %139 = vmatprep.subr.mxu0 0.0
    %140 = vmatpush1.msra.mxu0 0.0
    %141 = vmatprep.subr.mxu0 0.0
    %142 = vmatpush1.msra.mxu0 0.0
    %143 = vmatprep.subr.mxu0 0.0
    %144 = vmatpush1.msra.mxu0 0.0
    %145 = vmatprep.subr.mxu0 0.0
    %146 = vmatpush1.msra.mxu0 0.0
    %147 = vmatprep.subr.mxu0 0.0
    %148 = vmatpush1.msra.mxu0 0.0
    %149 = vmatprep.subr.mxu0 0.0
    %150 = vmatpush1.msra.mxu0 0.0
    %151 = vmatprep.subr.mxu0 0.0
    %152 = vmatpush1.msra.mxu0 0.0
    %153 = vmatprep.mubr.f32.mxu0 0.0
    %154 = vmatmul.mubr.f32.gmra.mrb[0].mxu0 %v80
    %v155 = vpop.f32.mrb[0].mxu0
    %v156 = vadd.f32 %v71, %v155
    %v157 = vpop.f32.mrb[0].mxu0
    %v158 = vadd.f32 %v75, %v157
    %159 = vdwg.mxu0
    %v160 = vtanh.pop %v156
    %v161 = vtanh.pop %v158
    %v162 = vld [vmem:[#allocation7] sm:$0xff]
    %v163 = vld [vmem:[#allocation7 + $0x8] sm:$0xff]
    %v164 = vld [vmem:[#allocation7 + $0x10] sm:$0xff]
    %v165 = vld [vmem:[#allocation7 + $0x18] sm:$0xff]
    %v166 = vld [vmem:[#allocation7 + $0x20] sm:$0xff]
    %v167 = vld [vmem:[#allocation7 + $0x28] sm:$0xff]
    %v168 = vld [vmem:[#allocation7 + $0x30] sm:$0xff]
    %v169 = vld [vmem:[#allocation7 + $0x38] sm:$0xff]
    %v170 = vld [vmem:[#allocation7 + $0x40] sm:$0xff]
    %v171 = vld [vmem:[#allocation7 + $0x48] sm:$0xff]
    %v172 = vld [vmem:[#allocation7 + $0x50] sm:$0xff]
    %v173 = vld [vmem:[#allocation7 + $0x58] sm:$0xff]
    %v174 = vld [vmem:[#allocation7 + $0x60] sm:$0xff]
    %v175 = vld [vmem:[#allocation7 + $0x68] sm:$0xff]
    %v176 = vld [vmem:[#allocation7 + $0x70] sm:$0xff]
    %v177 = vld [vmem:[#allocation7 + $0x78] sm:$0xff]
    %v178 = vld [vmem:[#allocation7 + $0x80] sm:$0xff]
    %v179 = vld [vmem:[#allocation7 + $0x88] sm:$0xff]
    %v180 = vld [vmem:[#allocation7 + $0x90] sm:$0xff]
    %v181 = vld [vmem:[#allocation7 + $0x98] sm:$0xff]
    %v182 = vld [vmem:[#allocation7 + $0xa0] sm:$0xff]
    %v183 = vld [vmem:[#allocation7 + $0xa8] sm:$0xff]
    %v184 = vld [vmem:[#allocation7 + $0xb0] sm:$0xff]
    %v185 = vld [vmem:[#allocation7 + $0xb8] sm:$0xff]
    %v186 = vld [vmem:[#allocation7 + $0xc0] sm:$0xff]
    %v187 = vld [vmem:[#allocation7 + $0xc8] sm:$0xff]
    %v188 = vld [vmem:[#allocation7 + $0xd0] sm:$0xff]
    %v189 = vld [vmem:[#allocation7 + $0xd8] sm:$0xff]
    %v190 = vld [vmem:[#allocation7 + $0xe0] sm:$0xff]
    %v191 = vld [vmem:[#allocation7 + $0xe8] sm:$0xff]
    %v192 = vld [vmem:[#allocation7 + $0xf0] sm:$0xff]
    %v193 = vld [vmem:[#allocation7 + $0xf8] sm:$0xff]
    %v195 = vlaneseq
    %v196 = vshrl.u32 %v195, 7
    %v197 = vsub.s32 0, %v196
    %v198 = vrot.slane %v59, %v197
    %200 = vmatprep.subr.mxu0 0.0
    %201 = vmatpush1.msra.mxu0 %v162
    %202 = vmatprep.subr.mxu0 0.0
    %203 = vmatpush1.msra.mxu0 %v163
    %204 = vmatprep.subr.mxu0 0.0
    %205 = vmatpush1.msra.mxu0 %v164
    %206 = vmatprep.subr.mxu0 0.0
    %207 = vmatpush1.msra.mxu0 %v165
    %208 = vmatprep.subr.mxu0 0.0
    %209 = vmatpush1.msra.mxu0 %v166
    %210 = vmatprep.subr.mxu0 0.0
    %211 = vmatpush1.msra.mxu0 %v167
    %212 = vmatprep.subr.mxu0 0.0
    %213 = vmatpush1.msra.mxu0 %v168
    %214 = vmatprep.subr.mxu0 0.0
    %215 = vmatpush1.msra.mxu0 %v169
    %216 = vmatprep.subr.mxu0 0.0
    %217 = vmatpush1.msra.mxu0 %v170
    %218 = vmatprep.subr.mxu0 0.0
    %219 = vmatpush1.msra.mxu0 %v171
    %220 = vmatprep.subr.mxu0 0.0
    %221 = vmatpush1.msra.mxu0 %v172
    %222 = vmatprep.subr.mxu0 0.0
    %223 = vmatpush1.msra.mxu0 %v173
    %224 = vmatprep.subr.mxu0 0.0
    %225 = vmatpush1.msra.mxu0 %v174
    %226 = vmatprep.subr.mxu0 0.0
    %227 = vmatpush1.msra.mxu0 %v175
    %228 = vmatprep.subr.mxu0 0.0
    %229 = vmatpush1.msra.mxu0 %v176
    %230 = vmatprep.subr.mxu0 0.0
    %231 = vmatpush1.msra.mxu0 %v177
    %232 = vmatprep.subr.mxu0 0.0
    %233 = vmatpush1.msra.mxu0 %v178
    %234 = vmatprep.subr.mxu0 0.0
    %235 = vmatpush1.msra.mxu0 %v179
    %236 = vmatprep.subr.mxu0 0.0
    %237 = vmatpush1.msra.mxu0 %v180
    %238 = vmatprep.subr.mxu0 0.0
    %239 = vmatpush1.msra.mxu0 %v181
    %240 = vmatprep.subr.mxu0 0.0
    %241 = vmatpush1.msra.mxu0 %v182
    %242 = vmatprep.subr.mxu0 0.0
    %243 = vmatpush1.msra.mxu0 %v183
    %244 = vmatprep.subr.mxu0 0.0
    %245 = vmatpush1.msra.mxu0 %v184
    %246 = vmatprep.subr.mxu0 0.0
    %247 = vmatpush1.msra.mxu0 %v185
    %248 = vmatprep.subr.mxu0 0.0
    %249 = vmatpush1.msra.mxu0 %v186
    %250 = vmatprep.subr.mxu0 0.0
    %251 = vmatpush1.msra.mxu0 %v187
    %252 = vmatprep.subr.mxu0 0.0
    %253 = vmatpush1.msra.mxu0 %v188
    %254 = vmatprep.subr.mxu0 0.0
    %255 = vmatpush1.msra.mxu0 %v189
    %256 = vmatprep.subr.mxu0 0.0
    %257 = vmatpush1.msra.mxu0 %v190
    %258 = vmatprep.subr.mxu0 0.0
    %259 = vmatpush1.msra.mxu0 %v191
    %260 = vmatprep.subr.mxu0 0.0
    %261 = vmatpush1.msra.mxu0 %v192
    %262 = vmatprep.subr.mxu0 0.0
    %263 = vmatpush1.msra.mxu0 %v193
    %264 = vmatprep.mubr.f32.mxu0 %v161
    %265 = vmatmul.mubr.f32.gmra.mrb[0].mxu0 %v160
    %v266 = vpop.f32.mrb[0].mxu0
    %v267 = vadd.f32 %v198, %v266
    %v268 = vpop.f32.mrb[0].mxu0
    %269 = vdwg.mxu0
    %v270 = vtanh.pop %v267
    %v271 = vld [vmem:[#allocation7 + $0x100] sm:$0x1]
    %v272 = vlaneseq
    %v273 = vshrl.u32 %v272, 7
    %v274 = vsub.s32 0, %v273
    %v275 = vrot.slane %v271, %v274
    %v276 = vmul.f32 %v270, %v275
    %277 = vadd.xlane.f32.xlu0 %v276
    %v278 = vpop.xlane.xlu0 %277
    %v280 = vlaneseq
    %v281 = vshrl.u32 %v280, 7
    %v282 = vsub.s32 0, %v281
    %v283 = vrot.slane %v60, %v282
    %v285 = vadd.f32 %v278, %v283
    %287 = vset.pattern.permute.xlu0 0
    %288 = vperm.xlu0 %287, %v285
    %v289 = vpop.permute.xlu0 %288
    %291 = vst [vmem:[#allocation8] sm:$0xff] %v289
    // Predicated region
    $region30: #{tpu_custom_call.1} parent=1 // pred_check
      _
    $region31: #{tpu_custom_call.1} parent=1 // pred_check_branch
      %293 = sbr.rel (0) target = $region33
    $region32: #{tpu_custom_call.1} parent=1 // pred_region
      %s295 = ssub.s32 128, 128
      %296 = vsyncadd [#allocation4], %s295
      %s298 = sshll.u32 [#allocation8], 4
      %s299 = int_to_ptr.vmem [resolvable:$true] %s298
      %301 = dma.vmem_to_hbm [thread:$0]  %s299, 128, %s4, [#allocation4]
    $region33: #{tpu_custom_call.1} parent=1 // pred_fallthru
      _
    // Predicated region
    $region34: #{tpu_custom_call.1} parent=1 // pred_check
      _
    $region35: #{tpu_custom_call.1} parent=1 // pred_check_branch
      %303 = sbr.rel (0) target = $region37
    $region36: #{tpu_custom_call.1} parent=1 // pred_region
      %304 = dma.done [#allocation4], 128
    $region37: #{tpu_custom_call.1} parent=1 // pred_fallthru
      _
    %305 = vsyncpa [#allocation3], 1
    %306 = vsyncpa [#allocation6], 1
    %307 = vsyncpa [#allocation4], 1

</llo_original>
